<compile_context>
chip_gen: v7x
topology: tpu7x:2x2x1
jax: 0.10.0
libtpu: 0.0.40
codegen_flags: <defaults>
</compile_context>

<pallas_src>
import functools

import jax
import jax.numpy as jnp
from jax.experimental import pallas as pl
from jax.experimental.pallas import tpu as pltpu


ACTION_N = 16              # stand-in for nmmo.Action.n
HIDDEN = 32                # config.HIDDEN
A_PAD = 128                # fused, lane-dense logit width (multiple of 128)
MXU_DTYPE = jnp.bfloat16   # matmul operand dtype (bf16 MXU on all generations)

# synthetic stand-in for nmmo.Action.edges / arg.edges
ACTION_SPACE = {
    "Move":   {"Direction": {"type": "Fixed",  "idxs": [0, 1, 2, 3]}},
    "Attack": {"Style":     {"type": "Fixed",  "idxs": [4, 5, 6]},
               "Target":    {"type": "Entity"}},
}


def _round_up(x, m):
    return (x + m - 1) // m * m


def _build_layout(action_space):
    """Static layout of the fused logit slab.

    Fixed args occupy [0, F_TOTAL); all Entity-typed args share one block at
    [ENT_OFF, ENT_OFF + N_ENT)  (they all see the same cands/lens in the
    reference, so their logits are identical and computed once).
    """
    fixed_idxs, fixed_slices, entity_args = [], {}, []
    off = 0
    for atn, args in action_space.items():
        for arg, spec in args.items():
            if spec["type"] == "Fixed":
                n = len(spec["idxs"])
                fixed_idxs.extend(spec["idxs"])
                fixed_slices[(atn, arg)] = (off, n)
                off += n
            else:
                entity_args.append((atn, arg))
    f_total = off
    f_pad = max(_round_up(f_total, 8), 8)   # sublane-align the fixed block
    ent_off = f_pad
    return fixed_idxs, fixed_slices, entity_args, f_total, f_pad, ent_off


(FIXED_IDXS, FIXED_SLICES, ENTITY_ARGS,
 F_TOTAL, F_PAD, ENT_OFF) = _build_layout(ACTION_SPACE)


# ----------------------------------------------------------------------------
# Fused Pallas kernel: one lane-dense logit slab for the whole action tree
# ----------------------------------------------------------------------------
def _output_kernel(obs_ref, fixed_ref, ent_ref, lens_ref,
                   wk_ref, bk_ref, wv_ref, bv_ref, out_ref,
                   *, f_total, ent_off):
    bm, h = obs_ref.shape
    _, n_ent, _ = ent_ref.shape
    f_pad = fixed_ref.shape[0]
    a_pad = out_ref.shape[-1]

    # ---- key branch, computed once: k = relu(obs @ Wk + bk) -> [bm, h] ----
    k = jnp.dot(obs_ref[...].astype(MXU_DTYPE), wk_ref[...].astype(MXU_DTYPE),
                preferred_element_type=jnp.float32)
    k = jnp.maximum(k + bk_ref[...], 0.0)

    # ---- val branch, one matmul across ALL candidate sets ----
    ent = ent_ref[...].reshape(bm * n_ent, h)
    all_c = jnp.concatenate([fixed_ref[...], ent], axis=0)    # [f_pad + bm*n_ent, h]
    v = jnp.dot(all_c.astype(MXU_DTYPE), wv_ref[...].astype(MXU_DTYPE),
                preferred_element_type=jnp.float32)
    v = jnp.maximum(v + bv_ref[...], 0.0)
    v_fixed = v[:f_pad]                                       # [f_pad, h] (batch-indep)
    v_ent = v[f_pad:].reshape(bm, n_ent, h)                   # [bm, n_ent, h]

    # ---- k·v contractions on the MXU ----
    # fixed: [bm, h] x [f_pad, h]^T -> [bm, f_pad]
    fixed_logits = jax.lax.dot_general(
        k, v_fixed, (((1,), (1,)), ((), ())),
        preferred_element_type=jnp.float32)
    # entity: batched [bm, 1, h] x [bm, n_ent, h]^T -> [bm, n_ent]
    ent_logits = jnp.einsum("bmh,bnh->bmn", k[:, None, :], v_ent,
                            preferred_element_type=jnp.float32)[:, 0, :]

    # ---- one lane-dense [bm, a_pad] slab, single unmasked store ----
    pad_w = a_pad - f_pad - n_ent
    logits = jnp.concatenate(
        [fixed_logits, ent_logits, jnp.zeros((bm, pad_w), jnp.float32)],
        axis=-1)                                              # [bm, a_pad]

    col = jax.lax.broadcasted_iota(jnp.int32, (bm, a_pad), 1)
    lens = lens_ref[...]                                      # [bm, 1] int32
    valid = (col < f_total) | ((col >= ent_off) & ((col - ent_off) < lens))
    out_ref[...] = jnp.where(valid, logits, 0.0)


def _fused_logits(obs, fixed_cands, lookup_entity, lookup_n, params,
                  *, block_b=None):
    """One pallas_call producing the fused [B, A_PAD] logit slab."""
    B, H = obs.shape
    _, n_ent, _ = lookup_entity.shape
    bm = B if block_b is None else block_b
    assert B % bm == 0, "batch must divide the batch tile"
    # TODO(synk): at production B / N_ENT, pick bm so (obs + ent + v) x 2
    #             buffers fits v7x's 64 MiB VMEM (v5e/v6e allow ~2x larger).

    kernel = functools.partial(_output_kernel, f_total=F_TOTAL, ent_off=ENT_OFF)
    return pl.pallas_call(
        kernel,
        out_shape=jax.ShapeDtypeStruct((B, A_PAD), jnp.float32),
        grid=(B // bm,),
        in_specs=[
            pl.BlockSpec((bm, H), lambda i: (i, 0)),            # obs
            pl.BlockSpec((F_PAD, H), lambda i: (0, 0)),         # fixed-arg embeddings
            pl.BlockSpec((bm, n_ent, H), lambda i: (i, 0, 0)),  # entity cands
            pl.BlockSpec((bm, 1), lambda i: (i, 0)),            # lens
            pl.BlockSpec((H, H), lambda i: (0, 0)),             # Wk
            pl.BlockSpec((1, H), lambda i: (0, 0)),             # bk
            pl.BlockSpec((H, H), lambda i: (0, 0)),             # Wv
            pl.BlockSpec((1, H), lambda i: (0, 0)),             # bv
        ],
        out_specs=pl.BlockSpec((bm, A_PAD), lambda i: (i, 0)),
        compiler_params=pltpu.CompilerParams(
            dimension_semantics=("parallel",)),
    )(obs, fixed_cands, lookup_entity, lookup_n,
      params["wk"], params["bk"], params["wv"], params["bv"])


# ----------------------------------------------------------------------------
# Output module glue (jitted; action-tree structure is static Python)
# ----------------------------------------------------------------------------
def init_params(key, h=HIDDEN, n_emb=ACTION_N):
    ks = jax.random.split(key, 5)
    s = 1.0 / jnp.sqrt(h)
    return {
        "wk":    jax.random.normal(ks[0], (h, h), jnp.float32) * s,
        "bk":    jax.random.normal(ks[1], (1, h), jnp.float32) * s,
        "wv":    jax.random.normal(ks[2], (h, h), jnp.float32) * s,
        "bv":    jax.random.normal(ks[3], (1, h), jnp.float32) * s,
        "embed": jax.random.normal(ks[4], (n_emb, h), jnp.float32),  # Embedding.weight
    }


@jax.jit
def output_forward(obs, lookup_entity, lookup_n, params):
    """Output.forward(obs, lookup) -> {action: {arg: logits}} (one fused kernel)."""
    fixed_cands = params["embed"][jnp.asarray(FIXED_IDXS, dtype=jnp.int32)]  # [F_TOTAL, H]
    fixed_cands = jnp.pad(fixed_cands, ((0, F_PAD - F_TOTAL), (0, 0)))       # [F_PAD, H]
    slab = _fused_logits(obs, fixed_cands, lookup_entity,
                         lookup_n.astype(jnp.int32), params)                 # [B, A_PAD]

    n_ent = lookup_entity.shape[1]
    rets = {}
    for atn, args in ACTION_SPACE.items():
        rets[atn] = {}
        for arg, spec in args.items():
            if spec["type"] == "Fixed":
                off, n = FIXED_SLICES[(atn, arg)]
                rets[atn][arg] = slab[:, off:off + n]
            else:
                rets[atn][arg] = slab[:, ENT_OFF:ENT_OFF + n_ent]
    return rets


# ----------------------------------------------------------------------------
# Pure-JAX f32 reference (PyTorch semantics) for a numerics check
# ----------------------------------------------------------------------------
def _reference_forward(obs, lookup_entity, lookup_n, params):
    def key_b(x):
        return jnp.maximum(x @ params["wk"] + params["bk"], 0.0)

    def val_b(x):
        return jnp.maximum(x @ params["wv"] + params["bv"], 0.0)

    k = key_b(obs)
    rets = {}
    for atn, args in ACTION_SPACE.items():
        rets[atn] = {}
        for arg, spec in args.items():
            if spec["type"] == "Fixed":
                cands = params["embed"][jnp.asarray(spec["idxs"])]
                v = val_b(cands)                                  # [n, H]
                logits = k @ v.T                                  # [B, n]
            else:
                v = val_b(lookup_entity)                          # [B, N, H]
                logits = jnp.sum(k[:, None, :] * v, axis=-1)      # [B, N]
                col = jnp.arange(logits.shape[-1])[None, :]
                logits = jnp.where(col >= lookup_n, 0.0, logits)
            rets[atn][arg] = logits
    return rets


if __name__ == "__main__":
    B, H, N_ENT = 2, HIDDEN, 8

    root = jax.random.PRNGKey(0)
    kp, ko, ke = jax.random.split(root, 3)

    params = init_params(kp, h=H, n_emb=ACTION_N)
    obs = jax.random.normal(ko, (B, H), jnp.float32)
    lookup_entity = jax.random.normal(ke, (B, N_ENT, H), jnp.float32)
    lookup_n = jnp.array([[5], [8]], dtype=jnp.int32)             # lookup['N']

    rets = output_forward(obs, lookup_entity, lookup_n, params)
    rets = jax.block_until_ready(rets)

    # shape / masking sanity
    assert rets["Move"]["Direction"].shape == (B, 4)
    assert rets["Attack"]["Style"].shape == (B, 3)
    assert rets["Attack"]["Target"].shape == (B, N_ENT)
    assert bool(jnp.all(rets["Attack"]["Target"][0, 5:] == 0.0))

    # numerics vs f32 reference (kernel matmuls run in bf16 on the MXU)
    ref = _reference_forward(obs, lookup_entity, lookup_n, params)
    for atn in ACTION_SPACE:
        for arg in ACTION_SPACE[atn]:
            assert bool(jnp.allclose(rets[atn][arg], ref[atn][arg],
                                     rtol=1e-1, atol=5e-2)), (atn, arg)

    print("KERNEL_OK")
</pallas_src>

<mosaic_0001>
module attributes {stable_mosaic.version = 11 : i64} {
  func.func @_output_kernel(%arg0: i32, %arg1: memref<2x32xf32, #tpu.memory_space<vmem>>, %arg2: memref<8x32xf32, #tpu.memory_space<vmem>>, %arg3: memref<2x8x32xf32, #tpu.memory_space<vmem>>, %arg4: memref<2x1xi32, #tpu.memory_space<vmem>>, %arg5: memref<32x32xf32, #tpu.memory_space<vmem>>, %arg6: memref<1x32xf32, #tpu.memory_space<vmem>>, %arg7: memref<32x32xf32, #tpu.memory_space<vmem>>, %arg8: memref<1x32xf32, #tpu.memory_space<vmem>>, %arg9: memref<2x128xf32, #tpu.memory_space<vmem>>) attributes {dimension_semantics = [#tpu.dimension_semantics<parallel>], iteration_bounds = array<i64: 1>, scalar_prefetch = 0 : i64, scratch_operands = 0 : i64, tpu.core_type = #tpu.core_type<tc>, window_params = [{transform_indices = @transform_0, window_bounds = array<i64: 2, 32>}, {pipeline_mode = #tpu.pipeline_mode<synchronous>, transform_indices = @transform_1, window_bounds = array<i64: 8, 32>}, {transform_indices = @transform_2, window_bounds = array<i64: 2, 8, 32>}, {transform_indices = @transform_3, window_bounds = array<i64: 2, 1>}, {pipeline_mode = #tpu.pipeline_mode<synchronous>, transform_indices = @transform_4, window_bounds = array<i64: 32, 32>}, {pipeline_mode = #tpu.pipeline_mode<synchronous>, transform_indices = @transform_5, window_bounds = array<i64: 1, 32>}, {pipeline_mode = #tpu.pipeline_mode<synchronous>, transform_indices = @transform_6, window_bounds = array<i64: 32, 32>}, {pipeline_mode = #tpu.pipeline_mode<synchronous>, transform_indices = @transform_7, window_bounds = array<i64: 1, 32>}, {transform_indices = @transform_8, window_bounds = array<i64: 2, 128>}]} {
    %c0 = arith.constant 0 : index
    %c0_0 = arith.constant 0 : index
    %0 = vector.load %arg1[%c0, %c0_0] : memref<2x32xf32, #tpu.memory_space<vmem>>, vector<2x32xf32>
    %1 = arith.truncf %0 : vector<2x32xf32> to vector<2x32xbf16>
    %c0_1 = arith.constant 0 : index
    %c0_2 = arith.constant 0 : index
    %2 = vector.load %arg5[%c0_1, %c0_2] : memref<32x32xf32, #tpu.memory_space<vmem>>, vector<32x32xf32>
    %3 = arith.truncf %2 : vector<32x32xf32> to vector<32x32xbf16>
    %cst = arith.constant dense<0.000000e+00> : vector<2x32xf32>
    %4 = tpu.matmul %1, %3, %cst {dimension_numbers = #tpu.dot_dimension_numbers<[1], [0], [0], [1], [0, 0, 1, 1], [], []>} : vector<2x32xbf16>, vector<32x32xbf16>, vector<2x32xf32> -> vector<2x32xf32>
    %c0_3 = arith.constant 0 : index
    %c0_4 = arith.constant 0 : index
    %5 = vector.load %arg6[%c0_3, %c0_4] : memref<1x32xf32, #tpu.memory_space<vmem>>, vector<1x32xf32>
    %6 = vector.broadcast %5 : vector<1x32xf32> to vector<2x32xf32>
    %7 = arith.addf %4, %6 : vector<2x32xf32>
    %cst_5 = arith.constant 0.000000e+00 : f32
    %8 = vector.broadcast %cst_5 : f32 to vector<2x32xf32>
    %9 = arith.maximumf %7, %8 : vector<2x32xf32>
    %c0_6 = arith.constant 0 : index
    %c0_7 = arith.constant 0 : index
    %c0_8 = arith.constant 0 : index
    %10 = vector.load %arg3[%c0_6, %c0_7, %c0_8] : memref<2x8x32xf32, #tpu.memory_space<vmem>>, vector<2x8x32xf32>
    %11 = vector.shape_cast %10 : vector<2x8x32xf32> to vector<16x32xf32>
    %c0_9 = arith.constant 0 : index
    %c0_10 = arith.constant 0 : index
    %12 = vector.load %arg2[%c0_9, %c0_10] : memref<8x32xf32, #tpu.memory_space<vmem>>, vector<8x32xf32>
    %13 = tpu.concatenate %12, %11 in 0 : vector<8x32xf32>, vector<16x32xf32> -> vector<24x32xf32>
    %14 = arith.truncf %13 : vector<24x32xf32> to vector<24x32xbf16>
    %c0_11 = arith.constant 0 : index
    %c0_12 = arith.constant 0 : index
    %15 = vector.load %arg7[%c0_11, %c0_12] : memref<32x32xf32, #tpu.memory_space<vmem>>, vector<32x32xf32>
    %16 = arith.truncf %15 : vector<32x32xf32> to vector<32x32xbf16>
    %cst_13 = arith.constant dense<0.000000e+00> : vector<24x32xf32>
    %17 = tpu.matmul %14, %16, %cst_13 {dimension_numbers = #tpu.dot_dimension_numbers<[1], [0], [0], [1], [0, 0, 1, 1], [], []>} : vector<24x32xbf16>, vector<32x32xbf16>, vector<24x32xf32> -> vector<24x32xf32>
    %c0_14 = arith.constant 0 : index
    %c0_15 = arith.constant 0 : index
    %18 = vector.load %arg8[%c0_14, %c0_15] : memref<1x32xf32, #tpu.memory_space<vmem>>, vector<1x32xf32>
    %19 = vector.broadcast %18 : vector<1x32xf32> to vector<24x32xf32>
    %20 = arith.addf %17, %19 : vector<24x32xf32>
    %cst_16 = arith.constant 0.000000e+00 : f32
    %21 = vector.broadcast %cst_16 : f32 to vector<24x32xf32>
    %22 = arith.maximumf %20, %21 : vector<24x32xf32>
    %23 = vector.extract_strided_slice %22 {offsets = [0, 0], sizes = [8, 32], strides = [1, 1]} : vector<24x32xf32> to vector<8x32xf32>
    %24 = vector.extract_strided_slice %22 {offsets = [8, 0], sizes = [16, 32], strides = [1, 1]} : vector<24x32xf32> to vector<16x32xf32>
    %25 = vector.shape_cast %24 : vector<16x32xf32> to vector<2x8x32xf32>
    %cst_17 = arith.constant dense<0.000000e+00> : vector<2x8xf32>
    %26 = tpu.matmul %9, %23, %cst_17 {dimension_numbers = #tpu.dot_dimension_numbers<[1], [1], [0], [0], [0, 0, 1, 0], [], []>} : vector<2x32xf32>, vector<8x32xf32>, vector<2x8xf32> -> vector<2x8xf32>
    %27 = vector.shape_cast %9 : vector<2x32xf32> to vector<2x1x32xf32>
    "tpu.trace_start"() <{level = 10 : i32, message = "bmh,bnh->bmn"}> : () -> ()
    %cst_18 = arith.constant dense<0.000000e+00> : vector<2x1x8xf32>
    %28 = tpu.matmul %27, %25, %cst_18 {dimension_numbers = #tpu.dot_dimension_numbers<[2], [2], [1], [1], [0, 0, 0, 1, 1, 1], [0], [0]>} : vector<2x1x32xf32>, vector<2x8x32xf32>, vector<2x1x8xf32> -> vector<2x1x8xf32>
    "tpu.trace_stop"() : () -> ()
    %29 = vector.shape_cast %28 : vector<2x1x8xf32> to vector<2x8xf32>
    %cst_19 = arith.constant 0.000000e+00 : f32
    %30 = vector.broadcast %cst_19 : f32 to vector<2x112xf32>
    %31 = tpu.concatenate %26, %29, %30 in 1 : vector<2x8xf32>, vector<2x8xf32>, vector<2x112xf32> -> vector<2x128xf32>
    %32 = tpu.iota {dimensions = array<i32: 1>} : vector<2x128xi32>
    %c0_20 = arith.constant 0 : index
    %c0_21 = arith.constant 0 : index
    %33 = vector.load %arg4[%c0_20, %c0_21] : memref<2x1xi32, #tpu.memory_space<vmem>>, vector<2x1xi32>
    %c7_i32 = arith.constant 7 : i32
    %34 = vector.broadcast %c7_i32 : i32 to vector<2x128xi32>
    %35 = arith.cmpi slt, %32, %34 : vector<2x128xi32>
    %c8_i32 = arith.constant 8 : i32
    %36 = vector.broadcast %c8_i32 : i32 to vector<2x128xi32>
    %37 = arith.cmpi sge, %32, %36 : vector<2x128xi32>
    %c8_i32_22 = arith.constant 8 : i32
    %38 = vector.broadcast %c8_i32_22 : i32 to vector<2x128xi32>
    %39 = arith.subi %32, %38 : vector<2x128xi32>
    %40 = vector.broadcast %33 : vector<2x1xi32> to vector<2x128xi32>
    %41 = arith.cmpi slt, %39, %40 : vector<2x128xi32>
    %42 = arith.andi %37, %41 : vector<2x128xi1>
    %43 = arith.ori %35, %42 : vector<2x128xi1>
    %cst_23 = arith.constant 0.000000e+00 : f32
    %44 = vector.broadcast %cst_23 : f32 to vector<2x128xf32>
    %45 = arith.select %43, %31, %44 : vector<2x128xi1>, vector<2x128xf32>
    %c0_24 = arith.constant 0 : index
    %c0_25 = arith.constant 0 : index
    %46 = vector.load %arg9[%c0_24, %c0_25] : memref<2x128xf32, #tpu.memory_space<vmem>>, vector<2x128xf32>
    tpu.vector_store %arg9[%c0_24, %c0_25], %45 {strides = array<i32>} : memref<2x128xf32, #tpu.memory_space<vmem>>, vector<2x128xf32>,
    return
  }
  func.func @transform_0(%arg0: i32) -> (i32, i32) {
    %c0_i32 = arith.constant 0 : i32
    %c0_i32_0 = arith.constant 0 : i32
    return %arg0, %c0_i32 : i32, i32
  }
  func.func @transform_1(%arg0: i32) -> (i32, i32) {
    %c0_i32 = arith.constant 0 : i32
    %c0_i32_0 = arith.constant 0 : i32
    %c0_i32_1 = arith.constant 0 : i32
    return %c0_i32, %c0_i32_0 : i32, i32
  }
  func.func @transform_2(%arg0: i32) -> (i32, i32, i32) {
    %c0_i32 = arith.constant 0 : i32
    %c0_i32_0 = arith.constant 0 : i32
    %c0_i32_1 = arith.constant 0 : i32
    return %arg0, %c0_i32, %c0_i32_0 : i32, i32, i32
  }
  func.func @transform_3(%arg0: i32) -> (i32, i32) {
    %c0_i32 = arith.constant 0 : i32
    %c0_i32_0 = arith.constant 0 : i32
    return %arg0, %c0_i32 : i32, i32
  }
  func.func @transform_4(%arg0: i32) -> (i32, i32) {
    %c0_i32 = arith.constant 0 : i32
    %c0_i32_0 = arith.constant 0 : i32
    %c0_i32_1 = arith.constant 0 : i32
    return %c0_i32, %c0_i32_0 : i32, i32
  }
  func.func @transform_5(%arg0: i32) -> (i32, i32) {
    %c0_i32 = arith.constant 0 : i32
    %c0_i32_0 = arith.constant 0 : i32
    %c0_i32_1 = arith.constant 0 : i32
    return %c0_i32, %c0_i32_0 : i32, i32
  }
  func.func @transform_6(%arg0: i32) -> (i32, i32) {
    %c0_i32 = arith.constant 0 : i32
    %c0_i32_0 = arith.constant 0 : i32
    %c0_i32_1 = arith.constant 0 : i32
    return %c0_i32, %c0_i32_0 : i32, i32
  }
  func.func @transform_7(%arg0: i32) -> (i32, i32) {
    %c0_i32 = arith.constant 0 : i32
    %c0_i32_0 = arith.constant 0 : i32
    %c0_i32_1 = arith.constant 0 : i32
    return %c0_i32, %c0_i32_0 : i32, i32
  }
  func.func @transform_8(%arg0: i32) -> (i32, i32) {
    %c0_i32 = arith.constant 0 : i32
    %c0_i32_0 = arith.constant 0 : i32
    return %arg0, %c0_i32 : i32, i32
  }
}

</mosaic_0001>

<llo_original>
// kernel: output_forward.1
$region0: #{output_forward.1}
  #allocation0 [shape = 'u32[]', space=smem, size = 0x4, offset = 0x4, fixed_abs, tag = 'smem constant byte address 0x4 - core index']
  #allocation1 [shape = 'u32[144,128]{1,0:T(1,128)}', space=vmem, size = 0x12000, scoped, tag = 'internal scratch']
  %s0 = inlined_call_operand.vmem [shape: f32[2,32], index: 0, kind: input, shape index: {}]
  %s1 = inlined_call_operand.vmem [shape: f32[8,32], index: 1, kind: input, shape index: {}]
  %s2 = inlined_call_operand.vmem [shape: f32[2,8,32], index: 2, kind: input, shape index: {}]
  %s3 = inlined_call_operand.vmem [shape: s32[2,1], index: 3, kind: input, shape index: {}]
  %s4 = inlined_call_operand.vmem [shape: f32[32,32], index: 4, kind: input, shape index: {}]
  %s5 = inlined_call_operand.vmem [shape: f32[1,32], index: 5, kind: input, shape index: {}]
  %s6 = inlined_call_operand.vmem [shape: f32[32,32], index: 6, kind: input, shape index: {}]
  %s7 = inlined_call_operand.vmem [shape: f32[1,32], index: 7, kind: input, shape index: {}]
  %s8 = inlined_call_operand.vmem [shape: f32[2,128], index: 8, kind: output, shape index: {}]
  %s9 = sld [smem:[#allocation0]]
  $region42: #{output_forward.1} parent=0
    _
  %s11 = ssub.s32 1, %s9
  %s12 = scalar_select 0, %s11, %s9
  // Predicated region
  $region2: #{output_forward.1} parent=0 // pred_check
    _
  $region3: #{output_forward.1} parent=0 // pred_check_branch
    %14 = sbr.rel (0) target = $region5
  $region4: #{output_forward.1} parent=0 // pred_region
    _
  $region5: #{output_forward.1} parent=0 // pred_fallthru
    _
  // Predicated region
  $region6: #{output_forward.1} parent=0 // pred_check
    _
  $region7: #{output_forward.1} parent=0 // pred_check_branch
    %16 = sbr.rel (0) target = $region9
  $region8: #{output_forward.1} parent=0 // pred_region
    _
  $region9: #{output_forward.1} parent=0 // pred_fallthru
    _
  // Predicated region
  $region10: #{output_forward.1} parent=0 // pred_check
    _
  $region11: #{output_forward.1} parent=0 // pred_check_branch
    %18 = sbr.rel (0) target = $region13
  $region12: #{output_forward.1} parent=0 // pred_region
    _
  $region13: #{output_forward.1} parent=0 // pred_fallthru
    _
  // Predicated region
  $region14: #{output_forward.1} parent=0 // pred_check
    _
  $region15: #{output_forward.1} parent=0 // pred_check_branch
    %20 = sbr.rel (0) target = $region17
  $region16: #{output_forward.1} parent=0 // pred_region
    _
  $region17: #{output_forward.1} parent=0 // pred_fallthru
    _
  // Predicated region
  $region18: #{output_forward.1} parent=0 // pred_check
    _
  $region19: #{output_forward.1} parent=0 // pred_check_branch
    %22 = sbr.rel (0) target = $region21
  $region20: #{output_forward.1} parent=0 // pred_region
    _
  $region21: #{output_forward.1} parent=0 // pred_fallthru
    _
  // Predicated region
  $region22: #{output_forward.1} parent=0 // pred_check
    _
  $region23: #{output_forward.1} parent=0 // pred_check_branch
    %24 = sbr.rel (0) target = $region25
  $region24: #{output_forward.1} parent=0 // pred_region
    _
  $region25: #{output_forward.1} parent=0 // pred_fallthru
    _
  // Predicated region
  $region26: #{output_forward.1} parent=0 // pred_check
    _
  $region27: #{output_forward.1} parent=0 // pred_check_branch
    %26 = sbr.rel (0) target = $region29
  $region28: #{output_forward.1} parent=0 // pred_region
    _
  $region29: #{output_forward.1} parent=0 // pred_fallthru
    _
  // Predicated region
  $region30: #{output_forward.1} parent=0 // pred_check
    _
  $region31: #{output_forward.1} parent=0 // pred_check_branch
    %28 = sbr.rel (0) target = $region33
  $region32: #{output_forward.1} parent=0 // pred_region
    _
  $region33: #{output_forward.1} parent=0 // pred_fallthru
    _
  %v30 = vld [vmem:[%s0] sm:$0x3]
  %v31 = vpack.c.bf16 %v30, %v30
  %v32 = vld [vmem:[%s4] sm:$0xff]
  %v33 = vld [vmem:[%s4 + $0x8] sm:$0xff]
  %v34 = vld [vmem:[%s4 + $0x10] sm:$0xff]
  %v35 = vld [vmem:[%s4 + $0x18] sm:$0xff]
  %v36 = vpack.c.bf16 %v33, %v32
  %v37 = vpack.c.bf16 %v35, %v34
  %v38 = vld [vmem:[%s5] sm:$0x1]
  %v40 = vlaneseq
  %v41 = vshrl.u32 %v40, 7
  %v42 = vsub.s32 0, %v41
  %v43 = vrot.slane %v38, %v42
  %vm45 = vcmask 261120
  %v47 = vsel %vm45, %v31, 0
  %49 = vmatprep.subr.bf16.mxu0 0
  %50 = vmatpush1.bf16.msra.mxu0 %v36
  %51 = vmatprep.subr.bf16.mxu0 0
  %52 = vmatpush1.bf16.msra.mxu0 %v37
  %53 = vmatprep.subr.bf16.mxu0 0
  %54 = vmatpush1.bf16.msra.mxu0 0
  %55 = vmatprep.subr.bf16.mxu0 0
  %56 = vmatpush1.bf16.msra.mxu0 0
  %57 = vmatprep.subr.bf16.mxu0 0
  %58 = vmatpush1.bf16.msra.mxu0 0
  %59 = vmatprep.subr.bf16.mxu0 0
  %60 = vmatpush1.bf16.msra.mxu0 0
  %61 = vmatprep.subr.bf16.mxu0 0
  %62 = vmatpush1.bf16.msra.mxu0 0
  %63 = vmatprep.subr.bf16.mxu0 0
  %64 = vmatpush1.bf16.msra.mxu0 0
  %65 = vmatprep.subr.bf16.mxu0 0
  %66 = vmatpush1.bf16.msra.mxu0 0
  %67 = vmatprep.subr.bf16.mxu0 0
  %68 = vmatpush1.bf16.msra.mxu0 0
  %69 = vmatprep.subr.bf16.mxu0 0
  %70 = vmatpush1.bf16.msra.mxu0 0
  %71 = vmatprep.subr.bf16.mxu0 0
  %72 = vmatpush1.bf16.msra.mxu0 0
  %73 = vmatprep.subr.bf16.mxu0 0
  %74 = vmatpush1.bf16.msra.mxu0 0
  %75 = vmatprep.subr.bf16.mxu0 0
  %76 = vmatpush1.bf16.msra.mxu0 0
  %77 = vmatprep.subr.bf16.mxu0 0
  %78 = vmatpush1.bf16.msra.mxu0 0
  %79 = vmatprep.subr.bf16.mxu0 0
  %80 = vmatpush1.bf16.msra.mxu0 0
  %81 = vmatprep.mubr.bf16.mxu0 0
  %82 = vmatmul.mubr.bf16.gmra.mrb[0].mxu0 %v47
  %v83 = vpop.f32.mrb[0].mxu0
  %v84 = vadd.f32 %v43, %v83
  %v85 = vpop.f32.mrb[0].mxu0
  %v86 = vpop.f32.mrb[0].mxu0
  %v87 = vpop.f32.mrb[0].mxu0
  %88 = vdwg.mxu0
  %v89 = vmax.f32 %v84, 0.0
  %v90 = vld [vmem:[%s2] sm:$0xff]
  %v91 = vld [vmem:[%s2 + $0x8] sm:$0xff]
  %v92 = vld [vmem:[%s1] sm:$0xff]
  %v93 = vpack.c.bf16 %v90, %v92
  %v94 = vpack.c.bf16 %v91, %v91
  %v95 = vld [vmem:[%s6] sm:$0xff]
  %v96 = vld [vmem:[%s6 + $0x8] sm:$0xff]
  %v97 = vld [vmem:[%s6 + $0x10] sm:$0xff]
  %v98 = vld [vmem:[%s6 + $0x18] sm:$0xff]
  %v99 = vpack.c.bf16 %v96, %v95
  %v100 = vpack.c.bf16 %v98, %v97
  %v101 = vld [vmem:[%s7] sm:$0x1]
  %v103 = vlaneseq
  %v104 = vshrl.u32 %v103, 7
  %v105 = vsub.s32 0, %v104
  %v106 = vrot.slane %v101, %v105
  %v109 = vsel %vm45, %v93, 0
  %v112 = vsel %vm45, %v94, 0
  %114 = vmatprep.subr.bf16.mxu0 0
  %115 = vmatpush1.bf16.msra.mxu0 %v99
  %116 = vmatprep.subr.bf16.mxu0 0
  %117 = vmatpush1.bf16.msra.mxu0 %v100
  %118 = vmatprep.subr.bf16.mxu0 0
  %119 = vmatpush1.bf16.msra.mxu0 0
  %120 = vmatprep.subr.bf16.mxu0 0
  %121 = vmatpush1.bf16.msra.mxu0 0
  %122 = vmatprep.subr.bf16.mxu0 0
  %123 = vmatpush1.bf16.msra.mxu0 0
  %124 = vmatprep.subr.bf16.mxu0 0
  %125 = vmatpush1.bf16.msra.mxu0 0
  %126 = vmatprep.subr.bf16.mxu0 0
  %127 = vmatpush1.bf16.msra.mxu0 0
  %128 = vmatprep.subr.bf16.mxu0 0
  %129 = vmatpush1.bf16.msra.mxu0 0
  %130 = vmatprep.subr.bf16.mxu0 0
  %131 = vmatpush1.bf16.msra.mxu0 0
  %132 = vmatprep.subr.bf16.mxu0 0
  %133 = vmatpush1.bf16.msra.mxu0 0
  %134 = vmatprep.subr.bf16.mxu0 0
  %135 = vmatpush1.bf16.msra.mxu0 0
  %136 = vmatprep.subr.bf16.mxu0 0
  %137 = vmatpush1.bf16.msra.mxu0 0
  %138 = vmatprep.subr.bf16.mxu0 0
  %139 = vmatpush1.bf16.msra.mxu0 0
  %140 = vmatprep.subr.bf16.mxu0 0
  %141 = vmatpush1.bf16.msra.mxu0 0
  %142 = vmatprep.subr.bf16.mxu0 0
  %143 = vmatpush1.bf16.msra.mxu0 0
  %144 = vmatprep.subr.bf16.mxu0 0
  %145 = vmatpush1.bf16.msra.mxu0 0
  %146 = vmatprep.mubr.bf16.mxu0 0
  %147 = vmatmul.mubr.bf16.gmra.mrb[0].mxu0 %v109
  %v148 = vpop.f32.mrb[0].mxu0
  %v149 = vadd.f32 %v106, %v148
  %v150 = vpop.f32.mrb[0].mxu0
  %v151 = vpop.f32.mrb[0].mxu0
  %v152 = vadd.f32 %v106, %v151
  %v153 = vpop.f32.mrb[0].mxu0
  %154 = vmatprep.mubr.bf16.mxu0 0
  %155 = vmatmul.mubr.bf16.gmra.mrb[0].mxu0 %v112
  %v156 = vpop.f32.mrb[0].mxu0
  %v157 = vadd.f32 %v106, %v156
  %v158 = vpop.f32.mrb[0].mxu0
  %v159 = vpop.f32.mrb[0].mxu0
  %v160 = vpop.f32.mrb[0].mxu0
  %161 = vdwg.mxu0
  %v162 = vmax.f32 %v149, 0.0
  %v163 = vmax.f32 %v152, 0.0
  %v164 = vmax.f32 %v157, 0.0
  %v166 = vsel %vm45, %v89, 0
  %v169 = vsel %vm45, %v162, 0
  %171 = vmatprep.subr.mxu0 0.0
  %172 = vmatpush1.xpose.msra.mxu0 %v169
  %173 = vmatprep.subr.mxu0 0.0
  %174 = vmatpush1.xpose.msra.mxu0 0.0
  %175 = vmatprep.subr.mxu0 0.0
  %176 = vmatpush1.xpose.msra.mxu0 0.0
  %177 = vmatprep.subr.mxu0 0.0
  %178 = vmatpush1.xpose.msra.mxu0 0.0
  %179 = vmatprep.subr.mxu0 0.0
  %180 = vmatpush1.xpose.msra.mxu0 0.0
  %181 = vmatprep.subr.mxu0 0.0
  %182 = vmatpush1.xpose.msra.mxu0 0.0
  %183 = vmatprep.subr.mxu0 0.0
  %184 = vmatpush1.xpose.msra.mxu0 0.0
  %185 = vmatprep.subr.mxu0 0.0
  %186 = vmatpush1.xpose.msra.mxu0 0.0
  %187 = vmatprep.subr.mxu0 0.0
  %188 = vmatpush1.xpose.msra.mxu0 0.0
  %189 = vmatprep.subr.mxu0 0.0
  %190 = vmatpush1.xpose.msra.mxu0 0.0
  %191 = vmatprep.subr.mxu0 0.0
  %192 = vmatpush1.xpose.msra.mxu0 0.0
  %193 = vmatprep.subr.mxu0 0.0
  %194 = vmatpush1.xpose.msra.mxu0 0.0
  %195 = vmatprep.subr.mxu0 0.0
  %196 = vmatpush1.xpose.msra.mxu0 0.0
  %197 = vmatprep.subr.mxu0 0.0
  %198 = vmatpush1.xpose.msra.mxu0 0.0
  %199 = vmatprep.subr.mxu0 0.0
  %200 = vmatpush1.xpose.msra.mxu0 0.0
  %201 = vmatprep.subr.mxu0 0.0
  %202 = vmatpush1.xpose.msra.mxu0 0.0
  %203 = vmatprep.subr.mxu0 0.0
  %204 = vmatpush1.xpose.msra.mxu0 0.0
  %205 = vmatprep.subr.mxu0 0.0
  %206 = vmatpush1.xpose.msra.mxu0 0.0
  %207 = vmatprep.subr.mxu0 0.0
  %208 = vmatpush1.xpose.msra.mxu0 0.0
  %209 = vmatprep.subr.mxu0 0.0
  %210 = vmatpush1.xpose.msra.mxu0 0.0
  %211 = vmatprep.subr.mxu0 0.0
  %212 = vmatpush1.xpose.msra.mxu0 0.0
  %213 = vmatprep.subr.mxu0 0.0
  %214 = vmatpush1.xpose.msra.mxu0 0.0
  %215 = vmatprep.subr.mxu0 0.0
  %216 = vmatpush1.xpose.msra.mxu0 0.0
  %217 = vmatprep.subr.mxu0 0.0
  %218 = vmatpush1.xpose.msra.mxu0 0.0
  %219 = vmatprep.subr.mxu0 0.0
  %220 = vmatpush1.xpose.msra.mxu0 0.0
  %221 = vmatprep.subr.mxu0 0.0
  %222 = vmatpush1.xpose.msra.mxu0 0.0
  %223 = vmatprep.subr.mxu0 0.0
  %224 = vmatpush1.xpose.msra.mxu0 0.0
  %225 = vmatprep.subr.mxu0 0.0
  %226 = vmatpush1.xpose.msra.mxu0 0.0
  %227 = vmatprep.subr.mxu0 0.0
  %228 = vmatpush1.xpose.msra.mxu0 0.0
  %229 = vmatprep.subr.mxu0 0.0
  %230 = vmatpush1.xpose.msra.mxu0 0.0
  %231 = vmatprep.subr.mxu0 0.0
  %232 = vmatpush1.xpose.msra.mxu0 0.0
  %233 = vmatprep.subr.mxu0 0.0
  %234 = vmatpush1.xpose.msra.mxu0 0.0
  %235 = vmatprep.mubr.f32.mxu0 0.0
  %236 = vmatmul.mubr.f32.gmra.mrb[0].mxu0 %v166
  %v237 = vpop.f32.mrb[0].mxu0
  %v238 = vadd.f32 0.0, %v237
  %v239 = vpop.f32.mrb[0].mxu0
  %240 = vdwg.mxu0
  %v242 = vunpack.c.l.s4 1966171168
  %v243 = vunpack.c.0.s8 %v242
  %v244 = vlaneseq
  %v245 = vshrl.u32 %v244, 7
  %v246 = vsub.s32 %v243, %v245
  %v247 = vrot.slane %v89, %v246
  %v248 = vcombine.high %v247, %v247
  %v250 = vunpack.c.l.s4 1966171168
  %v251 = vunpack.c.0.s8 %v250
  %v252 = vlaneseq
  %v253 = vshrl.u32 %v252, 7
  %v254 = vsub.s32 %v251, %v253
  %v255 = vrot.slane %v247, %v254
  %v257 = vunpack.c.l.s4 1966171168
  %v258 = vunpack.c.0.s8 %v257
  %v259 = vlaneseq
  %v260 = vshrl.u32 %v259, 7
  %v261 = vsub.s32 %v258, %v260
  %v262 = vrot.slane %v248, %v261
  %v263 = vsel %vm45, %v255, 0
  %v266 = vsel %vm45, %v163, 0
  %268 = vmatprep.subr.mxu0 0.0
  %269 = vmatpush1.xpose.msra.mxu0 %v266
  %270 = vmatprep.subr.mxu0 0.0
  %271 = vmatpush1.xpose.msra.mxu0 0.0
  %272 = vmatprep.subr.mxu0 0.0
  %273 = vmatpush1.xpose.msra.mxu0 0.0
  %274 = vmatprep.subr.mxu0 0.0
  %275 = vmatpush1.xpose.msra.mxu0 0.0
  %276 = vmatprep.subr.mxu0 0.0
  %277 = vmatpush1.xpose.msra.mxu0 0.0
  %278 = vmatprep.subr.mxu0 0.0
  %279 = vmatpush1.xpose.msra.mxu0 0.0
  %280 = vmatprep.subr.mxu0 0.0
  %281 = vmatpush1.xpose.msra.mxu0 0.0
  %282 = vmatprep.subr.mxu0 0.0
  %283 = vmatpush1.xpose.msra.mxu0 0.0
  %284 = vmatprep.subr.mxu0 0.0
  %285 = vmatpush1.xpose.msra.mxu0 0.0
  %286 = vmatprep.subr.mxu0 0.0
  %287 = vmatpush1.xpose.msra.mxu0 0.0
  %288 = vmatprep.subr.mxu0 0.0
  %289 = vmatpush1.xpose.msra.mxu0 0.0
  %290 = vmatprep.subr.mxu0 0.0
  %291 = vmatpush1.xpose.msra.mxu0 0.0
  %292 = vmatprep.subr.mxu0 0.0
  %293 = vmatpush1.xpose.msra.mxu0 0.0
  %294 = vmatprep.subr.mxu0 0.0
  %295 = vmatpush1.xpose.msra.mxu0 0.0
  %296 = vmatprep.subr.mxu0 0.0
  %297 = vmatpush1.xpose.msra.mxu0 0.0
  %298 = vmatprep.subr.mxu0 0.0
  %299 = vmatpush1.xpose.msra.mxu0 0.0
  %300 = vmatprep.subr.mxu0 0.0
  %301 = vmatpush1.xpose.msra.mxu0 0.0
  %302 = vmatprep.subr.mxu0 0.0
  %303 = vmatpush1.xpose.msra.mxu0 0.0
  %304 = vmatprep.subr.mxu0 0.0
  %305 = vmatpush1.xpose.msra.mxu0 0.0
  %306 = vmatprep.subr.mxu0 0.0
  %307 = vmatpush1.xpose.msra.mxu0 0.0
  %308 = vmatprep.subr.mxu0 0.0
  %309 = vmatpush1.xpose.msra.mxu0 0.0
  %310 = vmatprep.subr.mxu0 0.0
  %311 = vmatpush1.xpose.msra.mxu0 0.0
  %312 = vmatprep.subr.mxu0 0.0
  %313 = vmatpush1.xpose.msra.mxu0 0.0
  %314 = vmatprep.subr.mxu0 0.0
  %315 = vmatpush1.xpose.msra.mxu0 0.0
  %316 = vmatprep.subr.mxu0 0.0
  %317 = vmatpush1.xpose.msra.mxu0 0.0
  %318 = vmatprep.subr.mxu0 0.0
  %319 = vmatpush1.xpose.msra.mxu0 0.0
  %320 = vmatprep.subr.mxu0 0.0
  %321 = vmatpush1.xpose.msra.mxu0 0.0
  %322 = vmatprep.subr.mxu0 0.0
  %323 = vmatpush1.xpose.msra.mxu0 0.0
  %324 = vmatprep.subr.mxu0 0.0
  %325 = vmatpush1.xpose.msra.mxu0 0.0
  %326 = vmatprep.subr.mxu0 0.0
  %327 = vmatpush1.xpose.msra.mxu0 0.0
  %328 = vmatprep.subr.mxu0 0.0
  %329 = vmatpush1.xpose.msra.mxu0 0.0
  %330 = vmatprep.subr.mxu0 0.0
  %331 = vmatpush1.xpose.msra.mxu0 0.0
  %332 = vmatprep.mubr.f32.mxu0 0.0
  %333 = vmatmul.mubr.f32.gmra.mrb[0].mxu0 %v263
  %v334 = vpop.f32.mrb[0].mxu0
  %v335 = vadd.f32 0.0, %v334
  %v336 = vpop.f32.mrb[0].mxu0
  %337 = vdwg.mxu0
  %v338 = vsel %vm45, %v262, 0
  %v341 = vsel %vm45, %v164, 0
  %343 = vmatprep.subr.mxu0 0.0
  %344 = vmatpush1.xpose.msra.mxu0 %v341
  %345 = vmatprep.subr.mxu0 0.0
  %346 = vmatpush1.xpose.msra.mxu0 0.0
  %347 = vmatprep.subr.mxu0 0.0
  %348 = vmatpush1.xpose.msra.mxu0 0.0
  %349 = vmatprep.subr.mxu0 0.0
  %350 = vmatpush1.xpose.msra.mxu0 0.0
  %351 = vmatprep.subr.mxu0 0.0
  %352 = vmatpush1.xpose.msra.mxu0 0.0
  %353 = vmatprep.subr.mxu0 0.0
  %354 = vmatpush1.xpose.msra.mxu0 0.0
  %355 = vmatprep.subr.mxu0 0.0
  %356 = vmatpush1.xpose.msra.mxu0 0.0
  %357 = vmatprep.subr.mxu0 0.0
  %358 = vmatpush1.xpose.msra.mxu0 0.0
  %359 = vmatprep.subr.mxu0 0.0
  %360 = vmatpush1.xpose.msra.mxu0 0.0
  %361 = vmatprep.subr.mxu0 0.0
  %362 = vmatpush1.xpose.msra.mxu0 0.0
  %363 = vmatprep.subr.mxu0 0.0
  %364 = vmatpush1.xpose.msra.mxu0 0.0
  %365 = vmatprep.subr.mxu0 0.0
  %366 = vmatpush1.xpose.msra.mxu0 0.0
  %367 = vmatprep.subr.mxu0 0.0
  %368 = vmatpush1.xpose.msra.mxu0 0.0
  %369 = vmatprep.subr.mxu0 0.0
  %370 = vmatpush1.xpose.msra.mxu0 0.0
  %371 = vmatprep.subr.mxu0 0.0
  %372 = vmatpush1.xpose.msra.mxu0 0.0
  %373 = vmatprep.subr.mxu0 0.0
  %374 = vmatpush1.xpose.msra.mxu0 0.0
  %375 = vmatprep.subr.mxu0 0.0
  %376 = vmatpush1.xpose.msra.mxu0 0.0
  %377 = vmatprep.subr.mxu0 0.0
  %378 = vmatpush1.xpose.msra.mxu0 0.0
  %379 = vmatprep.subr.mxu0 0.0
  %380 = vmatpush1.xpose.msra.mxu0 0.0
  %381 = vmatprep.subr.mxu0 0.0
  %382 = vmatpush1.xpose.msra.mxu0 0.0
  %383 = vmatprep.subr.mxu0 0.0
  %384 = vmatpush1.xpose.msra.mxu0 0.0
  %385 = vmatprep.subr.mxu0 0.0
  %386 = vmatpush1.xpose.msra.mxu0 0.0
  %387 = vmatprep.subr.mxu0 0.0
  %388 = vmatpush1.xpose.msra.mxu0 0.0
  %389 = vmatprep.subr.mxu0 0.0
  %390 = vmatpush1.xpose.msra.mxu0 0.0
  %391 = vmatprep.subr.mxu0 0.0
  %392 = vmatpush1.xpose.msra.mxu0 0.0
  %393 = vmatprep.subr.mxu0 0.0
  %394 = vmatpush1.xpose.msra.mxu0 0.0
  %395 = vmatprep.subr.mxu0 0.0
  %396 = vmatpush1.xpose.msra.mxu0 0.0
  %397 = vmatprep.subr.mxu0 0.0
  %398 = vmatpush1.xpose.msra.mxu0 0.0
  %399 = vmatprep.subr.mxu0 0.0
  %400 = vmatpush1.xpose.msra.mxu0 0.0
  %401 = vmatprep.subr.mxu0 0.0
  %402 = vmatpush1.xpose.msra.mxu0 0.0
  %403 = vmatprep.subr.mxu0 0.0
  %404 = vmatpush1.xpose.msra.mxu0 0.0
  %405 = vmatprep.subr.mxu0 0.0
  %406 = vmatpush1.xpose.msra.mxu0 0.0
  %407 = vmatprep.mubr.f32.mxu0 0.0
  %408 = vmatmul.mubr.f32.gmra.mrb[0].mxu0 %v338
  %v409 = vpop.f32.mrb[0].mxu0
  %v410 = vadd.f32 0.0, %v409
  %v411 = vpop.f32.mrb[0].mxu0
  %412 = vdwg.mxu0
  %v415 = vrot.slane %v410, 7
  %vm416 = vcmask 1041409
  %v417 = vsel %vm416, %v415, %v335
  %418 = vrot.lane.b32.xlu0 %v417, 8
  %v419 = vpop.permute.xlu0 %418
  %vm421 = vcmask 64512
  %v422 = vsel %vm421, %v238, %v419
  %vm423 = vcmask 130048
  %v424 = vsel %vm423, %v422, 0.0
  %v425 = vlaneseq
  %v426 = vand.u32 %v425, 127
  %v427 = vld [vmem:[%s3] sm:$0x3]
  %vm428 = vcmp.lt.s32.totalorder %v426, 7
  %vm429 = vcmp.ge.s32.totalorder %v426, 8
  %v430 = vsub.s32 %v426, 8
  %431 = vset.pattern.permute.xlu0 0
  %432 = vperm.xlu0 %431, %v427
  %v433 = vpop.permute.xlu0 %432
  %vm434 = vcmp.lt.s32.totalorder %v430, %v433
  %vm435 = vmand %vm429, %vm434
  %vm436 = vmor %vm428, %vm435
  %v437 = vsel %vm436, %v424, 0.0
  %438 = vst [vmem:[%s8] sm:$0x3] %v437
  // Predicated region
  $region34: #{output_forward.1} parent=0 // pred_check
    _
  $region35: #{output_forward.1} parent=0 // pred_check_branch
    %440 = sbr.rel (0) target = $region37
  $region36: #{output_forward.1} parent=0 // pred_region
    _
  $region37: #{output_forward.1} parent=0 // pred_fallthru
    _
  // Predicated region
  $region38: #{output_forward.1} parent=0 // pred_check
    _
  $region39: #{output_forward.1} parent=0 // pred_check_branch
    %442 = sbr.rel (0) target = $region41
  $region40: #{output_forward.1} parent=0 // pred_region
    _
  $region41: #{output_forward.1} parent=0 // pred_fallthru
    _

</llo_original>
